<compile_context>
chip_gen: v7x
topology: tpu7x:2x2x1
jax: 0.10.0
libtpu: 0.0.40
codegen_flags: <defaults>
</compile_context>

<pallas_src>
import functools

import jax
import jax.numpy as jnp
from jax import lax
from jax.experimental import pallas as pl
from jax.experimental.pallas import tpu as pltpu

LANES = 128
ROW_TILE_MAX = 8192          # 8192x128 f32 = 4 MiB per input block; 16 MiB double-buffered
VMEM_LIMIT_BYTES = 32 * 1024 * 1024   # raises v5e's 16 MiB scoped default; == v6e/v7x default
PAD_LOGIT = -30.0            # sentinel: bce ~ 1e-13, (1-p) rounds to 0 in f32 -> zero loss


def _focal_kernel(x_ref, t_ref, out_ref, acc_ref, *,
                  alpha, gamma, rows, row_tile, ragged, binary_targets):
    i = pl.program_id(0)
    nblk = pl.num_programs(0)

    @pl.when(i == 0)
    def _():
        acc_ref[...] = jnp.zeros_like(acc_ref)

    x = x_ref[...].astype(jnp.float32)
    t = t_ref[...].astype(jnp.float32)

    # binary_cross_entropy_with_logits (reduction='none'), numerically stable form:
    #   bce = max(x, 0) - x*t + log1p(exp(-|x|))
    e = jnp.exp(-jnp.abs(x))
    bce = jnp.maximum(x, 0.0) - x * t + jnp.log1p(e)

    if binary_targets:
        # For hard {0,1} targets: p = exp(-bce) = numer / (1 + e) with
        #   numer = e  when (t==1 and x<0) or (t==0 and x>=0), else 1.
        # Saves one EUP transcendental per element (exp(-bce)); uses a cheap approx recip.
        numer = jnp.where((x < 0.0) == (t > 0.5), e, 1.0)
        p = numer * pl.reciprocal(1.0 + e, approx=True)
    else:
        p = jnp.exp(-bce)

    omp = jnp.maximum(1.0 - p, 0.0)   # clamp: p can round slightly above 1 when bce underflows

    if float(gamma) == 2.0:
        focal = omp * omp                       # VPU mul, no pow
    elif float(gamma) == int(gamma):
        focal = lax.integer_pow(omp, int(gamma))
    else:
        # TODO(synk): non-integer gamma falls back to pow (exp*log on the EUP)
        focal = omp ** float(gamma)

    loss = focal * bce
    if float(alpha) != 1.0:
        loss = float(alpha) * loss

    def _reduce(l):
        if row_tile % 8 == 0:
            # full-vreg adds only; defer sublane/lane reduce to the epilogue
            return jnp.sum(l.reshape(row_tile // 8, 8, LANES), axis=0)
        return jnp.sum(l, axis=0, keepdims=True)

    if ragged:
        @pl.when(i < nblk - 1)
        def _():
            acc_ref[...] += _reduce(loss)

        @pl.when(i == nblk - 1)
        def _():
            # Only the final (ragged) block pays for the mask; it also hides any
            # garbage read from the out-of-bounds portion of the last block.
            row = lax.broadcasted_iota(jnp.int32, loss.shape, 0)
            valid = (i * row_tile + row) < rows
            acc_ref[...] += _reduce(jnp.where(valid, loss, 0.0))
    else:
        acc_ref[...] += _reduce(loss)

    @pl.when(i == nblk - 1)
    def _():
        out_ref[...] = jnp.sum(acc_ref[...]).reshape(1, 1)


def binary_focal_loss(inputs, targets, *, alpha=1.0, gamma=2.0,
                      binary_targets=False, row_tile_max=ROW_TILE_MAX):
    """Mean binary focal loss over all elements (logits=True, reduce=True).

    binary_targets=True enables a faster (one fewer transcendental) path that is
    only valid when every target is exactly 0 or 1.
    """
    assert inputs.shape == targets.shape
    n_elems = int(inputs.size)

    x = inputs.reshape(-1)
    t = targets.reshape(-1)

    # Pad only to the next multiple of 128 (lane width), and only if needed, using a
    # sentinel whose focal loss is exactly 0 in f32 (so no in-kernel mask for it and
    # the mean divisor stays the true element count).
    rem = n_elems % LANES
    if rem != 0:
        pad = LANES - rem
        x = jnp.pad(x, (0, pad), mode="constant", constant_values=PAD_LOGIT)
        t = jnp.pad(t, (0, pad), mode="constant", constant_values=0)

    rows = (n_elems + LANES - 1) // LANES
    x2 = x.reshape(rows, LANES)
    t2 = t.reshape(rows, LANES)

    if rows <= row_tile_max:
        row_tile = rows          # single full-extent block (exempt from (8,128) rule)
    else:
        row_tile = row_tile_max  # multiple of 32 -> valid for f32/bf16/int8 blocks
    nblk = pl.cdiv(rows, row_tile)
    ragged = (rows % row_tile) != 0
    acc_rows = 8 if row_tile % 8 == 0 else 1

    kernel = functools.partial(
        _focal_kernel,
        alpha=float(alpha),
        gamma=float(gamma),
        rows=rows,
        row_tile=row_tile,
        ragged=ragged,
        binary_targets=bool(binary_targets),
    )

    total = pl.pallas_call(
        kernel,
        out_shape=jax.ShapeDtypeStruct((1, 1), jnp.float32),
        grid_spec=pltpu.PrefetchScalarGridSpec(
            num_scalar_prefetch=0,
            grid=(nblk,),
            in_specs=[
                pl.BlockSpec((row_tile, LANES), lambda i: (i, 0)),
                pl.BlockSpec((row_tile, LANES), lambda i: (i, 0)),
            ],
            out_specs=pl.BlockSpec((1, 1), lambda i: (0, 0)),
            scratch_shapes=[pltpu.VMEM((acc_rows, LANES), jnp.float32)],
        ),
        compiler_params=pltpu.CompilerParams(
            dimension_semantics=("arbitrary",),
            vmem_limit_bytes=VMEM_LIMIT_BYTES,
        ),
    )(x2, t2)

    return total[0, 0] / n_elems


def _reference(inputs, targets, alpha=1.0, gamma=2.0):
    x = inputs.astype(jnp.float32)
    t = targets.astype(jnp.float32)
    bce = jnp.maximum(x, 0.0) - x * t + jnp.log1p(jnp.exp(-jnp.abs(x)))
    p = jnp.exp(-bce)
    loss = alpha * jnp.maximum(1.0 - p, 0.0) ** gamma * bce
    return jnp.mean(loss)


if __name__ == "__main__":
    key = jax.random.PRNGKey(0)
    k1, k2, k3, k4, k5, k6 = jax.random.split(key, 6)

    # NCHW-shaped inputs consistent with a segmentation-style use of this loss.
    shape = (2, 4, 16, 16)
    logits = jax.random.normal(k1, shape, dtype=jnp.float32)
    targets = (jax.random.uniform(k2, shape) > 0.5).astype(jnp.float32)

    out = jax.block_until_ready(binary_focal_loss(logits, targets, alpha=1.0, gamma=2.0))
    ref = _reference(logits, targets)
    assert jnp.allclose(out, ref, rtol=1e-5, atol=1e-6), (out, ref)

    # Hard-target fast path (one fewer transcendental, approx reciprocal) -> looser tol.
    out_b = jax.block_until_ready(binary_focal_loss(logits, targets, binary_targets=True))
    assert jnp.allclose(out_b, ref, rtol=1e-2, atol=1e-4), (out_b, ref)

    # Ragged shape (not a multiple of 128) exercises the sentinel-padding path.
    shape2 = (2, 3, 9, 13)
    logits2 = jax.random.normal(k3, shape2, dtype=jnp.float32)
    targets2 = (jax.random.uniform(k4, shape2) > 0.5).astype(jnp.float32)
    out2 = jax.block_until_ready(binary_focal_loss(logits2, targets2))
    ref2 = _reference(logits2, targets2)
    assert jnp.allclose(out2, ref2, rtol=1e-5, atol=1e-6), (out2, ref2)

    # Multi-block + ragged last block (masked @pl.when path, (8,128) accumulator),
    # exercised with a small row_tile override so the test stays tiny.
    shape3 = (2, 4, 40, 40)
    logits3 = jax.random.normal(k5, shape3, dtype=jnp.float32)
    targets3 = (jax.random.uniform(k6, shape3) > 0.5).astype(jnp.float32)
    out3 = jax.block_until_ready(binary_focal_loss(logits3, targets3, row_tile_max=16))
    ref3 = _reference(logits3, targets3)
    assert jnp.allclose(out3, ref3, rtol=1e-5, atol=1e-6), (out3, ref3)

    print("KERNEL_OK")
</pallas_src>

<mosaic_0001>
module attributes {stable_mosaic.version = 11 : i64} {
  func.func @_focal_kernel(%arg0: i32, %arg1: memref<16x128xf32, #tpu.memory_space<vmem>>, %arg2: memref<16x128xf32, #tpu.memory_space<vmem>>, %arg3: memref<1x1xf32, #tpu.memory_space<vmem>>, %arg4: memref<8x128xf32, #tpu.memory_space<vmem>>) attributes {dimension_semantics = [#tpu.dimension_semantics<arbitrary>], iteration_bounds = array<i64: 1>, scalar_prefetch = 0 : i64, scratch_operands = 1 : i64, tpu.core_type = #tpu.core_type<tc>, window_params = [{transform_indices = @transform_0, window_bounds = array<i64: 16, 128>}, {transform_indices = @transform_1, window_bounds = array<i64: 16, 128>}, {pipeline_mode = #tpu.pipeline_mode<synchronous>, transform_indices = @transform_2, window_bounds = array<i64: 1, 1>}]} {
    %c0_i32 = arith.constant 0 : i32
    %0 = arith.cmpi eq, %arg0, %c0_i32 : i32
    %1 = arith.extui %0 : i1 to i32
    %c0_i32_0 = arith.constant 0 : i32
    %2 = arith.cmpi ne, %1, %c0_i32_0 : i32
    scf.if %2 {
      %cst_15 = arith.constant 0.000000e+00 : f32
      %32 = vector.broadcast %cst_15 : f32 to vector<8x128xf32>
      %c0_16 = arith.constant 0 : index
      %c0_17 = arith.constant 0 : index
      %33 = vector.load %arg4[%c0_16, %c0_17] : memref<8x128xf32, #tpu.memory_space<vmem>>, vector<8x128xf32>
      tpu.vector_store %arg4[%c0_16, %c0_17], %32 {strides = array<i32>} : memref<8x128xf32, #tpu.memory_space<vmem>>, vector<8x128xf32>,
    } else {
    }
    %c0 = arith.constant 0 : index
    %c0_1 = arith.constant 0 : index
    %3 = vector.load %arg1[%c0, %c0_1] : memref<16x128xf32, #tpu.memory_space<vmem>>, vector<16x128xf32>
    %c0_2 = arith.constant 0 : index
    %c0_3 = arith.constant 0 : index
    %4 = vector.load %arg2[%c0_2, %c0_3] : memref<16x128xf32, #tpu.memory_space<vmem>>, vector<16x128xf32>
    %5 = math.absf %3 : vector<16x128xf32>
    %cst = arith.constant 0.000000e+00 : f32
    %6 = vector.broadcast %cst : f32 to vector<16x128xf32>
    %7 = arith.subf %6, %5 : vector<16x128xf32>
    %8 = math.exp %7 : vector<16x128xf32>
    %cst_4 = arith.constant 0.000000e+00 : f32
    %9 = vector.broadcast %cst_4 : f32 to vector<16x128xf32>
    %10 = arith.maximumf %3, %9 : vector<16x128xf32>
    %11 = arith.mulf %3, %4 : vector<16x128xf32>
    %12 = arith.subf %10, %11 : vector<16x128xf32>
    %13 = math.log1p %8 : vector<16x128xf32>
    %14 = arith.addf %12, %13 : vector<16x128xf32>
    %cst_5 = arith.constant 0.000000e+00 : f32
    %15 = vector.broadcast %cst_5 : f32 to vector<16x128xf32>
    %16 = arith.subf %15, %14 : vector<16x128xf32>
    %17 = math.exp %16 : vector<16x128xf32>
    %cst_6 = arith.constant 1.000000e+00 : f32
    %18 = vector.broadcast %cst_6 : f32 to vector<16x128xf32>
    %19 = arith.subf %18, %17 : vector<16x128xf32>
    %cst_7 = arith.constant 0.000000e+00 : f32
    %20 = vector.broadcast %cst_7 : f32 to vector<16x128xf32>
    %21 = arith.maximumf %19, %20 : vector<16x128xf32>
    %22 = arith.mulf %21, %21 : vector<16x128xf32>
    %23 = arith.mulf %22, %14 : vector<16x128xf32>
    %c0_8 = arith.constant 0 : index
    %c0_9 = arith.constant 0 : index
    %24 = vector.load %arg4[%c0_8, %c0_9] : memref<8x128xf32, #tpu.memory_space<vmem>>, vector<8x128xf32>
    %25 = vector.shape_cast %23 : vector<16x128xf32> to vector<2x8x128xf32>
    %cst_10 = arith.constant dense<0.000000e+00> : vector<8x128xf32>
    %26 = vector.multi_reduction <add>, %25, %cst_10 [0] : vector<2x8x128xf32> to vector<8x128xf32>
    %27 = arith.addf %24, %26 : vector<8x128xf32>
    %c0_11 = arith.constant 0 : index
    %c0_12 = arith.constant 0 : index
    %28 = vector.load %arg4[%c0_11, %c0_12] : memref<8x128xf32, #tpu.memory_space<vmem>>, vector<8x128xf32>
    tpu.vector_store %arg4[%c0_11, %c0_12], %27 {strides = array<i32>} : memref<8x128xf32, #tpu.memory_space<vmem>>, vector<8x128xf32>,
    %c0_i32_13 = arith.constant 0 : i32
    %29 = arith.cmpi eq, %arg0, %c0_i32_13 : i32
    %30 = arith.extui %29 : i1 to i32
    %c0_i32_14 = arith.constant 0 : i32
    %31 = arith.cmpi ne, %30, %c0_i32_14 : i32
    scf.if %31 {
      %c0_15 = arith.constant 0 : index
      %c0_16 = arith.constant 0 : index
      %32 = vector.load %arg4[%c0_15, %c0_16] : memref<8x128xf32, #tpu.memory_space<vmem>>, vector<8x128xf32>
      %33 = vector.shape_cast %32 : vector<8x128xf32> to vector<1x8x128xf32>
      %cst_17 = arith.constant dense<0.000000e+00> : vector<1xf32>
      %34 = vector.multi_reduction <add>, %33, %cst_17 [1, 2] : vector<1x8x128xf32> to vector<1xf32>
      %35 = vector.shape_cast %34 : vector<1xf32> to vector<1x1x1xf32>
      %36 = vector.extract %35[0, 0, 0] : f32 from vector<1x1x1xf32>
      %37 = vector.broadcast %36 : f32 to vector<1x1xf32>
      %c0_18 = arith.constant 0 : index
      %c0_19 = arith.constant 0 : index
      %38 = vector.load %arg3[%c0_18, %c0_19] : memref<1x1xf32, #tpu.memory_space<vmem>>, vector<1x1xf32>
      tpu.vector_store %arg3[%c0_18, %c0_19], %37 {strides = array<i32>} : memref<1x1xf32, #tpu.memory_space<vmem>>, vector<1x1xf32>,
    } else {
    }
    return
  }
  func.func @transform_0(%arg0: i32) -> (i32, i32) {
    %c0_i32 = arith.constant 0 : i32
    %c0_i32_0 = arith.constant 0 : i32
    return %arg0, %c0_i32 : i32, i32
  }
  func.func @transform_1(%arg0: i32) -> (i32, i32) {
    %c0_i32 = arith.constant 0 : i32
    %c0_i32_0 = arith.constant 0 : i32
    return %arg0, %c0_i32 : i32, i32
  }
  func.func @transform_2(%arg0: i32) -> (i32, i32) {
    %c0_i32 = arith.constant 0 : i32
    %c0_i32_0 = arith.constant 0 : i32
    %c0_i32_1 = arith.constant 0 : i32
    return %c0_i32, %c0_i32_0 : i32, i32
  }
}

</mosaic_0001>

<llo_original>
// kernel: tpu_custom_call.1
$region0: #{tpu_custom_call.1}
  #allocation0 [shape = 'u32[]', space=smem, size = 0x4, offset = 0x4, fixed_abs, tag = 'smem constant byte address 0x4 - core index']
  #allocation1 [shape = 'u32[144,128]{1,0:T(1,128)}', space=vmem, size = 0x12000, scoped, tag = 'internal scratch']
  #allocation2 [shape = 'f32[8,128]{1,0:T(8,128)}', space=vmem, size = 0x1000, scoped, tag = 'scratch operand']
  %s0 = inlined_call_operand.hbm [shape: f32[16,128], index: 0, kind: input, shape index: {}]
  %s1 = inlined_call_operand.hbm [shape: f32[16,128], index: 1, kind: input, shape index: {}]
  %s2 = inlined_call_operand.hbm [shape: f32[1,1], index: 2, kind: output, shape index: {}]
  %s3 = sld [smem:[#allocation0]]
  $region34: #{tpu_custom_call.1} parent=0
    _
  %s5 = ssub.s32 1, %s3
  %s6 = scalar_select 0, %s5, %s3
  $region1: #{tpu_custom_call.1} parent=0
    #allocation3 [shape = 'u8[8192]{0}', space=vmem, size = 0x2000, scoped, tag = 'input window, operand 0, single buffered']
    #allocation4 [shape = 's32[1]{0}', space=sflag, size = 0x4, scoped, tag = 'scoped memory for tpu_custom_call.1']
    #allocation5 [shape = 's32[1]{0}', space=sflag, size = 0x4, scoped, tag = 'scoped memory for tpu_custom_call.1']
    #allocation6 [shape = 'u8[8192]{0}', space=vmem, size = 0x2000, scoped, tag = 'input window, operand 1, single buffered']
    #allocation7 [shape = 's32[1]{0}', space=sflag, size = 0x4, scoped, tag = 'scoped memory for tpu_custom_call.1']
    #allocation8 [shape = 'u8[512]{0}', space=vmem, size = 0x400, scoped, tag = 'output window, operand 0, single buffered']
    %7 = vsyncpa [#allocation4], 0
    %8 = vsyncpa [#allocation7], 0
    %9 = vsyncpa [#allocation5], 0
    // Predicated region
    $region2: #{tpu_custom_call.1} parent=1 // pred_check
      _
    $region3: #{tpu_custom_call.1} parent=1 // pred_check_branch
      %11 = sbr.rel (0) target = $region5
    $region4: #{tpu_custom_call.1} parent=1 // pred_region
      %s13 = ssub.s32 256, 256
      %14 = vsyncadd [#allocation4], %s13
      %s15 = sshll.u32 [#allocation3], 4
      %s16 = int_to_ptr.vmem [resolvable:$true] %s15
      %21 = dma.hbm_to_vmem [thread:$0]  %s0, 256, %s16, [#allocation4], 128, 128, 8
    $region5: #{tpu_custom_call.1} parent=1 // pred_fallthru
      _
    // Predicated region
    $region6: #{tpu_custom_call.1} parent=1 // pred_check
      _
    $region7: #{tpu_custom_call.1} parent=1 // pred_check_branch
      %23 = sbr.rel (0) target = $region9
    $region8: #{tpu_custom_call.1} parent=1 // pred_region
      %s25 = ssub.s32 256, 256
      %26 = vsyncadd [#allocation7], %s25
      %s27 = sshll.u32 [#allocation6], 4
      %s28 = int_to_ptr.vmem [resolvable:$true] %s27
      %33 = dma.hbm_to_vmem [thread:$0]  %s1, 256, %s28, [#allocation7], 128, 128, 8
    $region9: #{tpu_custom_call.1} parent=1 // pred_fallthru
      _
    // Predicated region
    $region10: #{tpu_custom_call.1} parent=1 // pred_check
      _
    $region11: #{tpu_custom_call.1} parent=1 // pred_check_branch
      %35 = sbr.rel (0) target = $region13
    $region12: #{tpu_custom_call.1} parent=1 // pred_region
      %36 = dma.done [#allocation4], 256
    $region13: #{tpu_custom_call.1} parent=1 // pred_fallthru
      _
    // Predicated region
    $region14: #{tpu_custom_call.1} parent=1 // pred_check
      _
    $region15: #{tpu_custom_call.1} parent=1 // pred_check_branch
      %38 = sbr.rel (0) target = $region17
    $region16: #{tpu_custom_call.1} parent=1 // pred_region
      %39 = dma.done [#allocation7], 256
    $region17: #{tpu_custom_call.1} parent=1 // pred_fallthru
      _
    %p40 = scmp.eq.s32.totalorder 0, 0
    // Predicated region
    $region18: #{tpu_custom_call.1} parent=1 // pred_check
      %p41 = pneg %p40
    $region19: #{tpu_custom_call.1} parent=1 // pred_check_branch
      %43 = sbr.rel (%p41) target = $region21
    $region20: #{tpu_custom_call.1} parent=1 // pred_region
      %44 = vst [vmem:[#allocation2] sm:$0xff] 0.0
    $region21: #{tpu_custom_call.1} parent=1 // pred_fallthru
      _
    %v45 = vld [vmem:[#allocation3] sm:$0xff]
    %v46 = vld [vmem:[#allocation3 + $0x8] sm:$0xff]
    %v47 = vld [vmem:[#allocation6] sm:$0xff]
    %v48 = vld [vmem:[#allocation6 + $0x8] sm:$0xff]
    %v49 = vand.u32 2147483647, %v45
    %v50 = vand.u32 2147483647, %v46
    %v51 = vsub.f32 0.0, %v49
    %v52 = vsub.f32 0.0, %v50
    %v53 = vmul.f32 %v51, 1.442695
    %v54 = vpow.pop %v53
    %v55 = vmul.f32 %v52, 1.442695
    %v56 = vpow.pop %v55
    %v57 = vmax.f32 %v45, 0.0
    %v58 = vmax.f32 %v46, 0.0
    %v59 = vmul.f32 %v45, %v47
    %v60 = vmul.f32 %v46, %v48
    %v61 = vsub.f32 %v57, %v59
    %v62 = vsub.f32 %v58, %v60
    %v63 = vadd.f32 %v54, 1.0
    %v64 = vlog2.pop %v63
    %v65 = vmul.f32 %v64, 0.6931472
    %v66 = vmul.f32 -0.5, %v54
    %v67 = vadd.f32 %v66, 1.0
    %v68 = vmul.f32 %v67, %v54
    %v69 = vand.u32 2147483647, %v54
    %vm70 = vcmp.lt.f32.partialorder %v69, 0.0004427343
    %v71 = vsel %vm70, %v68, %v65
    %v72 = vadd.f32 %v56, 1.0
    %v73 = vlog2.pop %v72
    %v74 = vmul.f32 %v73, 0.6931472
    %v75 = vmul.f32 -0.5, %v56
    %v76 = vadd.f32 %v75, 1.0
    %v77 = vmul.f32 %v76, %v56
    %v78 = vand.u32 2147483647, %v56
    %vm79 = vcmp.lt.f32.partialorder %v78, 0.0004427343
    %v80 = vsel %vm79, %v77, %v74
    %v81 = vadd.f32 %v61, %v71
    %v82 = vadd.f32 %v62, %v80
    %v83 = vsub.f32 0.0, %v81
    %v84 = vsub.f32 0.0, %v82
    %v85 = vmul.f32 %v83, 1.442695
    %v86 = vpow.pop %v85
    %v87 = vmul.f32 %v84, 1.442695
    %v88 = vpow.pop %v87
    %v89 = vsub.f32 1.0, %v86
    %v90 = vsub.f32 1.0, %v88
    %v91 = vmax.f32 %v89, 0.0
    %v92 = vmax.f32 %v90, 0.0
    %v93 = vmul.f32 %v91, %v91
    %v94 = vmul.f32 %v92, %v92
    %v95 = vmul.f32 %v93, %v81
    %v96 = vmul.f32 %v94, %v82
    %v97 = vld [vmem:[#allocation2] sm:$0xff]
    %v98 = vadd.f32 %v95, %v96
    %v99 = vadd.f32 %v97, %v98
    %100 = vst [vmem:[#allocation2] sm:$0xff] %v99
    // Predicated region
    $region22: #{tpu_custom_call.1} parent=1 // pred_check
      %p101 = pneg %p40
    $region23: #{tpu_custom_call.1} parent=1 // pred_check_branch
      %103 = sbr.rel (%p101) target = $region25
    $region24: #{tpu_custom_call.1} parent=1 // pred_region
      %v104 = vld [vmem:[#allocation2] sm:$0xff]
      %105 = vadd.xlane.f32.xlu0 %v104
      %v106 = vpop.xlane.xlu0 %105
      %v107 = vrot.slane %v106, 4
      %v108 = vadd.f32 %v106, %v107
      %v109 = vrot.slane %v108, 2
      %v110 = vadd.f32 %v108, %v109
      %v111 = vrot.slane %v110, 1
      %v112 = vadd.f32 %v110, %v111
      %s113 = vtos %v112
      %v114 = vstv %s113
      %vm115 = vcmask 0
      %116 = vst.msk [vmem:[#allocation8] sm:$0x1] %vm115, %v114
    $region25: #{tpu_custom_call.1} parent=1 // pred_fallthru
      _
    // Predicated region
    $region26: #{tpu_custom_call.1} parent=1 // pred_check
      _
    $region27: #{tpu_custom_call.1} parent=1 // pred_check_branch
      %118 = sbr.rel (0) target = $region29
    $region28: #{tpu_custom_call.1} parent=1 // pred_region
      %s120 = ssub.s32 16, 16
      %121 = vsyncadd [#allocation5], %s120
      %s123 = sshll.u32 [#allocation8], 4
      %s124 = int_to_ptr.vmem [resolvable:$true] %s123
      %126 = dma.vmem_to_hbm [thread:$0]  %s124, 16, %s2, [#allocation5]
    $region29: #{tpu_custom_call.1} parent=1 // pred_fallthru
      _
    // Predicated region
    $region30: #{tpu_custom_call.1} parent=1 // pred_check
      _
    $region31: #{tpu_custom_call.1} parent=1 // pred_check_branch
      %128 = sbr.rel (0) target = $region33
    $region32: #{tpu_custom_call.1} parent=1 // pred_region
      %129 = dma.done [#allocation5], 16
    $region33: #{tpu_custom_call.1} parent=1 // pred_fallthru
      _
    %130 = vsyncpa [#allocation4], 1
    %131 = vsyncpa [#allocation7], 1
    %132 = vsyncpa [#allocation5], 1

</llo_original>
